<compile_context>
chip_gen: v6e
topology: v6e:2x2x1
jax: 0.10.0
libtpu: 0.0.40
codegen_flags: <defaults>
</compile_context>

<pallas_src>
import functools

import numpy as np
import jax
import jax.numpy as jnp
from jax import lax
from jax.experimental import pallas as pl
from jax.experimental.pallas import tpu as pltpu

# ---------------------------------------------------------------------------
# Module hyper-parameters (DiscriminatorEpilogue.__init__)
# ---------------------------------------------------------------------------
IN_CHANNELS   = 8
CMAP_DIM      = 8
RESOLUTION    = 8
IMG_CHANNELS  = 3          # only used by the 'skip' architecture (not built here)
NUM_CLASSES   = 6
MBSTD_GROUP   = 4
MBSTD_NUM_CH  = 1
LRELU_SLOPE   = 0.2
LRELU_GAIN    = float(np.sqrt(2.0))


def _lrelu(v):
    # StyleGAN bias_act 'lrelu': leaky_relu(x, 0.2) * sqrt(2)
    return jnp.maximum(v, LRELU_SLOPE * v) * LRELU_GAIN


# ---------------------------------------------------------------------------
# Fused kernel: mbstd + conv(3x3,pad1) + lrelu + fc + lrelu + adv/class heads
# ---------------------------------------------------------------------------
def _epilogue_kernel(x_ref, cmap_ref, wconv_ref, aux_ref, head_ref, out_ref,
                     *, group_size, cmap_dim, num_classes, channels):
    C = channels
    x = x_ref[...]                                   # (N, C*H*W) f32, lane-dense
    N = x.shape[0]
    G = min(group_size, N)
    M = N // G

    # ---- MinibatchStdLayer (num_channels=1) --------------------------------
    # Group of sample n = {n + k*M mod N}.  Coset sums are built with sublane
    # rotations (pltpu.roll on the otherwise-idle XLU) + full-vreg VPU adds:
    # no sub-(8,128) slices, and the group statistic already sits on every
    # member row, so no tile/broadcast-back is needed.  All math stays f32.
    if G > 1:
        gsum = x
        for k in range(1, G):
            gsum = gsum + pltpu.roll(x, k * M, axis=0)
        mean = gsum * (1.0 / G)
        d = x - mean
        sq = d * d
        vsum = sq
        for k in range(1, G):
            vsum = vsum + pltpu.roll(sq, k * M, axis=0)
        var = vsum * (1.0 / G)
    else:
        var = jnp.zeros_like(x)
    std = jnp.sqrt(var + 1e-8)                       # (N, C*H*W)
    s_col = jnp.mean(std, axis=1, keepdims=True)     # (N, 1) per-group stddev statistic

    # ---- 3x3 conv (padding=1) as ONE bf16 MXU matmul ------------------------
    # wconv_ref is the init-time-expanded, zero-padding-aware conv matrix stored
    # in bf16 (it dominates the prologue DMA bytes).  Only the MXU operands are
    # bf16; accumulation and all element-wise math stay f32.  The constant mbstd
    # channel is added as s_n * tstd (border tap counts handled exactly at init).
    bconv = aux_ref[C:C + 1, :]                      # (1, C*H*W) conv bias (per-pixel bcast)
    tstd  = aux_ref[C + 1:C + 2, :]                  # (1, C*H*W) mbstd-channel tap sums
    feat = jnp.dot(x.astype(jnp.bfloat16), wconv_ref[...],
                   preferred_element_type=jnp.float32)            # (N, C*H*W)
    feat = _lrelu(feat + bconv + s_col * tstd)

    # ---- fc (+lrelu): contract lanes against the lane-dense (C, CHW) weight --
    wfc = aux_ref[0:C, :]                            # (C, C*H*W), rows = out features
    shared = lax.dot_general(feat, wfc, (((1,), (1,)), ((), ())),
                             preferred_element_type=jnp.float32)  # (N, C)
    bfc = head_ref[C:C + 1, 0:C]                     # (1, C)
    shared = _lrelu(shared + bfc)

    # ---- fused adversarial + classification heads ---------------------------
    whead = head_ref[0:C, :]                         # (C, 128), zero-padded columns
    bhead = head_ref[C + 1:C + 2, :]                 # (1, 128)
    head = jnp.dot(shared, whead,
                   preferred_element_type=jnp.float32) + bhead    # (N, 128)
    # 1/sqrt(cmap_dim) was folded into the adversarial columns/bias at init.
    adv = jnp.sum(head[:, :cmap_dim] * cmap_ref[...], axis=1, keepdims=True)   # (N, 1)
    # Single lane-combined output slab: [adv | ac] -> one store, one writeback DMA.
    out_ref[:, 0:1] = adv
    out_ref[:, 1:1 + num_classes] = head[:, cmap_dim:cmap_dim + num_classes]


# ---------------------------------------------------------------------------
# Wrapper
# ---------------------------------------------------------------------------
def discriminator_epilogue(x_nchw, img, cmap, params):
    del img  # architecture='resnet' (module default): no fromrgb skip branch
    N, C, H, W = x_nchw.shape
    assert C == IN_CHANNELS and H == RESOLUTION and W == RESOLUTION
    G = min(MBSTD_GROUP, N)
    assert N % G == 0, "MinibatchStdLayer requires N % group_size == 0"
    # TODO(synk): for N >> 8 add a leading grid axis over mbstd groups
    # (dimension_semantics=("parallel",)) so v7x's second TensorCore is used.
    CHW = C * H * W
    NO = 1 + NUM_CLASSES
    x2 = x_nchw.astype(jnp.float32).reshape(N, CHW)   # free row-major collapse (no transpose)

    flops = 2 * (N * CHW * CHW + N * CHW * C + N * C * 128)
    bytes_accessed = (4 * N * CHW + 2 * CHW * CHW + 4 * (C + 2) * CHW
                      + 4 * (C + 2) * 128 + 4 * N * CMAP_DIM + 4 * N * NO)

    out = pl.pallas_call(
        functools.partial(_epilogue_kernel, group_size=MBSTD_GROUP,
                          cmap_dim=CMAP_DIM, num_classes=NUM_CLASSES,
                          channels=IN_CHANNELS),
        out_shape=jax.ShapeDtypeStruct((N, NO), jnp.float32),
        in_specs=[pl.BlockSpec(memory_space=pltpu.MemorySpace.VMEM)] * 5,
        out_specs=pl.BlockSpec(memory_space=pltpu.MemorySpace.VMEM),
        cost_estimate=pl.CostEstimate(flops=int(flops),
                                      transcendentals=int(N * CHW),
                                      bytes_accessed=int(bytes_accessed)),
    )(x2, cmap.astype(jnp.float32),
      params["wconv_mat"], params["aux"], params["head_pack"])

    adv = out[:, :1]
    ac = out[:, 1:]
    return adv, ac


# ---------------------------------------------------------------------------
# Deterministic parameter init (shapes/scales per StyleGAN2 layers) + kernel-
# ready pre-processing (all layout/packing work done once here, never at runtime).
# ---------------------------------------------------------------------------
def init_params(key):
    C, R = IN_CHANNELS, RESOLUTION
    Cin = C + MBSTD_NUM_CH
    CHW = C * R * R
    NH = CMAP_DIM + NUM_CLASSES
    k = jax.random.split(key, 4)

    wconv_raw = jax.random.normal(k[0], (C, Cin, 3, 3), jnp.float32)    # OIHW
    wfc_raw   = jax.random.normal(k[1], (C, CHW), jnp.float32)          # (out, in), in=(c,h,w)
    wout_raw  = jax.random.normal(k[2], (CMAP_DIM, C), jnp.float32)
    wac_raw   = jax.random.normal(k[3], (NUM_CLASSES, C), jnp.float32)

    conv_gain = 1.0 / np.sqrt(Cin * 9)
    fc_gain   = 1.0 / np.sqrt(CHW)
    head_gain = 1.0 / np.sqrt(C)
    inv_cmap  = 1.0 / np.sqrt(CMAP_DIM)

    wc = np.asarray(wconv_raw) * conv_gain                              # (Cout, Cin, 3, 3)

    # Dense conv-as-matrix: rows = input (ci, h', w'), cols = output (co, h, w).
    # Only in-bounds taps are written, which reproduces zero padding exactly.
    # NOTE: (CHW)^2 grows quadratically; for real StyleGAN sizes use im2col/per-tap + grid.
    B = np.zeros((C, R, R, C, R, R), np.float32)                        # [ci, h', w', co, h, w]
    T = np.zeros((C, R, R), np.float32)                                 # mbstd-channel tap sums
    for dy in range(3):
        h_lo, h_hi = max(0, 1 - dy), R - max(0, dy - 1)
        for dx in range(3):
            w_lo, w_hi = max(0, 1 - dx), R - max(0, dx - 1)
            w_tap = wc[:, :C, dy, dx].T                                 # [ci, co]
            for h in range(h_lo, h_hi):
                for w in range(w_lo, w_hi):
                    B[:, h + dy - 1, w + dx - 1, :, h, w] = w_tap
            T[:, h_lo:h_hi, w_lo:w_hi] += wc[:, C, dy, dx][:, None, None]
    # bf16 storage for the dominant MXU weight (halves the big HBM->VMEM DMA).
    wconv_mat = jnp.asarray(B.reshape(CHW, CHW)).astype(jnp.bfloat16)   # (512, 512) bf16

    bconv = np.zeros((C,), np.float32)            # Conv2dLayer bias (init 0)
    bfc   = np.zeros((C,), np.float32)            # FullyConnectedLayer biases (init 0)
    bout  = np.zeros((CMAP_DIM,), np.float32)
    bac   = np.zeros((NUM_CLASSES,), np.float32)

    # aux slab (C+2, CHW) f32: rows [0:C] = fc weight (lane-dense, rows = out features,
    # lanes in (c,h,w) order), row [C] = conv bias broadcast over pixels, [C+1] = tap sums.
    aux = np.zeros((C + 2, CHW), np.float32)
    aux[0:C] = np.asarray(wfc_raw) * fc_gain
    aux[C] = np.repeat(bconv, R * R)
    aux[C + 1] = T.reshape(CHW)

    # head slab (C+2, 128) f32: rows [0:C] = concat(out, ac_out) weights (1/sqrt(cmap_dim)
    # folded into the adversarial columns), row [C] = fc bias, row [C+1] = head bias.
    head_pack = np.zeros((C + 2, 128), np.float32)
    head_pack[0:C, 0:CMAP_DIM] = np.asarray(wout_raw).T * (head_gain * inv_cmap)
    head_pack[0:C, CMAP_DIM:NH] = np.asarray(wac_raw).T * head_gain
    head_pack[C, 0:C] = bfc
    head_pack[C + 1, 0:CMAP_DIM] = bout * inv_cmap
    head_pack[C + 1, CMAP_DIM:NH] = bac

    params = dict(wconv_mat=wconv_mat, aux=jnp.asarray(aux), head_pack=jnp.asarray(head_pack))
    raw = dict(wconv=wconv_raw, wfc=wfc_raw, wout=wout_raw, wac=wac_raw)
    return params, raw


# ---------------------------------------------------------------------------
# Pure-JAX reference (mirrors the PyTorch forward in NCHW, f32 throughout)
# ---------------------------------------------------------------------------
def reference(x_nchw, cmap, raw):
    N, C, H, W = x_nchw.shape
    G = min(MBSTD_GROUP, N)
    M = N // G
    y = x_nchw.reshape(G, M, 1, C, H, W)
    y = y - y.mean(axis=0)
    y = (y * y).mean(axis=0)
    y = jnp.sqrt(y + 1e-8)
    y = y.mean(axis=(2, 3, 4))                     # (M, 1)
    y = y.reshape(M, 1, 1, 1)
    y = jnp.tile(y, (G, 1, H, W))                  # (N, 1, H, W)
    x5 = jnp.concatenate([x_nchw, y], axis=1)

    Cin = C + 1
    wconv = raw["wconv"] * (1.0 / np.sqrt(Cin * 9))
    conv = lax.conv_general_dilated(x5, wconv, (1, 1), ((1, 1), (1, 1)),
                                    dimension_numbers=("NCHW", "OIHW", "NCHW"))
    conv = _lrelu(conv)                            # bias is zero
    flat = conv.reshape(N, -1)                     # (c, h, w) flatten order
    shared = _lrelu(flat @ (raw["wfc"] * (1.0 / np.sqrt(C * H * W))).T)
    adv = shared @ (raw["wout"] * (1.0 / np.sqrt(C))).T
    ac = shared @ (raw["wac"] * (1.0 / np.sqrt(C))).T
    adv = (adv * cmap).sum(axis=1, keepdims=True) * (1.0 / np.sqrt(CMAP_DIM))
    return adv, ac


if __name__ == "__main__":
    key = jax.random.PRNGKey(0)
    kx, kimg, kc, kp = jax.random.split(key, 4)
    N = 8
    x = jax.random.normal(kx, (N, IN_CHANNELS, RESOLUTION, RESOLUTION), jnp.float32)
    img = jax.random.normal(kimg, (N, IMG_CHANNELS, RESOLUTION, RESOLUTION), jnp.float32)
    cmap = jax.random.normal(kc, (N, CMAP_DIM), jnp.float32)
    params, raw = init_params(kp)

    fwd = jax.jit(discriminator_epilogue)
    adv, ac = fwd(x, img, cmap, params)
    jax.block_until_ready((adv, ac))

    adv_ref, ac_ref = reference(x, cmap, raw)
    assert adv.shape == (N, 1) and ac.shape == (N, NUM_CLASSES)
    # Tolerance relaxed vs the all-f32 v1: the conv matmul now uses bf16 MXU operands
    # (weights stored bf16, activations cast at the MXU input); accumulation stays f32,
    # so the remaining error is ~1e-2 absolute on O(1)-magnitude logits.
    np.testing.assert_allclose(np.asarray(adv), np.asarray(adv_ref), rtol=5e-2, atol=5e-2)
    np.testing.assert_allclose(np.asarray(ac), np.asarray(ac_ref), rtol=5e-2, atol=5e-2)
    print("KERNEL_OK")
</pallas_src>

<mosaic_0001>
module attributes {stable_mosaic.version = 11 : i64} {
  func.func @_epilogue_kernel(%arg0: memref<8x512xf32, #tpu.memory_space<vmem>>, %arg1: memref<8x8xf32, #tpu.memory_space<vmem>>, %arg2: memref<512x512xbf16, #tpu.memory_space<vmem>>, %arg3: memref<10x512xf32, #tpu.memory_space<vmem>>, %arg4: memref<10x128xf32, #tpu.memory_space<vmem>>, %arg5: memref<8x7xf32, #tpu.memory_space<vmem>>) attributes {dimension_semantics = [], scalar_prefetch = 0 : i64, scratch_operands = 0 : i64, tpu.core_type = #tpu.core_type<tc>} {
    %c0 = arith.constant 0 : index
    %c0_0 = arith.constant 0 : index
    %0 = vector.load %arg0[%c0, %c0_0] : memref<8x512xf32, #tpu.memory_space<vmem>>, vector<8x512xf32>
    %c2_i32 = arith.constant 2 : i32
    %1 = tpu.dynamic_rotate %0 by %c2_i32 dim 0 : vector<8x512xf32>, i32 -> vector<8x512xf32>
    %2 = arith.addf %0, %1 : vector<8x512xf32>
    %c4_i32 = arith.constant 4 : i32
    %3 = tpu.dynamic_rotate %0 by %c4_i32 dim 0 : vector<8x512xf32>, i32 -> vector<8x512xf32>
    %4 = arith.addf %2, %3 : vector<8x512xf32>
    %c6_i32 = arith.constant 6 : i32
    %5 = tpu.dynamic_rotate %0 by %c6_i32 dim 0 : vector<8x512xf32>, i32 -> vector<8x512xf32>
    %6 = arith.addf %4, %5 : vector<8x512xf32>
    %cst = arith.constant 2.500000e-01 : f32
    %7 = vector.broadcast %cst : f32 to vector<8x512xf32>
    %8 = arith.mulf %6, %7 : vector<8x512xf32>
    %9 = arith.subf %0, %8 : vector<8x512xf32>
    %10 = arith.mulf %9, %9 : vector<8x512xf32>
    %c2_i32_1 = arith.constant 2 : i32
    %11 = tpu.dynamic_rotate %10 by %c2_i32_1 dim 0 : vector<8x512xf32>, i32 -> vector<8x512xf32>
    %12 = arith.addf %10, %11 : vector<8x512xf32>
    %c4_i32_2 = arith.constant 4 : i32
    %13 = tpu.dynamic_rotate %10 by %c4_i32_2 dim 0 : vector<8x512xf32>, i32 -> vector<8x512xf32>
    %14 = arith.addf %12, %13 : vector<8x512xf32>
    %c6_i32_3 = arith.constant 6 : i32
    %15 = tpu.dynamic_rotate %10 by %c6_i32_3 dim 0 : vector<8x512xf32>, i32 -> vector<8x512xf32>
    %16 = arith.addf %14, %15 : vector<8x512xf32>
    %cst_4 = arith.constant 2.500000e-01 : f32
    %17 = vector.broadcast %cst_4 : f32 to vector<8x512xf32>
    %18 = arith.mulf %16, %17 : vector<8x512xf32>
    %cst_5 = arith.constant 9.99999993E-9 : f32
    %19 = vector.broadcast %cst_5 : f32 to vector<8x512xf32>
    %20 = arith.addf %18, %19 : vector<8x512xf32>
    %21 = math.sqrt %20 : vector<8x512xf32>
    %cst_6 = arith.constant dense<0.000000e+00> : vector<8xf32>
    %22 = vector.multi_reduction <add>, %21, %cst_6 [1] : vector<8x512xf32> to vector<8xf32>
    %23 = vector.shape_cast %22 : vector<8xf32> to vector<8x1xf32>
    %cst_7 = arith.constant 5.120000e+02 : f32
    %24 = vector.broadcast %cst_7 : f32 to vector<8x1xf32>
    %25 = arith.divf %23, %24 : vector<8x1xf32>
    %c8 = arith.constant 8 : index
    %c0_8 = arith.constant 0 : index
    %26 = vector.load %arg3[%c8, %c0_8] : memref<10x512xf32, #tpu.memory_space<vmem>>, vector<1x512xf32>
    %c9 = arith.constant 9 : index
    %c0_9 = arith.constant 0 : index
    %27 = vector.load %arg3[%c9, %c0_9] : memref<10x512xf32, #tpu.memory_space<vmem>>, vector<1x512xf32>
    %28 = arith.truncf %0 : vector<8x512xf32> to vector<8x512xbf16>
    %c0_10 = arith.constant 0 : index
    %c0_11 = arith.constant 0 : index
    %29 = vector.load %arg2[%c0_10, %c0_11] : memref<512x512xbf16, #tpu.memory_space<vmem>>, vector<512x512xbf16>
    %cst_12 = arith.constant dense<0.000000e+00> : vector<8x512xf32>
    %30 = tpu.matmul %28, %29, %cst_12 {dimension_numbers = #tpu.dot_dimension_numbers<[1], [0], [0], [1], [0, 0, 1, 1], [], []>} : vector<8x512xbf16>, vector<512x512xbf16>, vector<8x512xf32> -> vector<8x512xf32>
    %31 = vector.broadcast %26 : vector<1x512xf32> to vector<8x512xf32>
    %32 = arith.addf %30, %31 : vector<8x512xf32>
    %33 = vector.broadcast %25 : vector<8x1xf32> to vector<8x512xf32>
    %34 = vector.broadcast %27 : vector<1x512xf32> to vector<8x512xf32>
    %35 = arith.mulf %33, %34 : vector<8x512xf32>
    %36 = arith.addf %32, %35 : vector<8x512xf32>
    %cst_13 = arith.constant 2.000000e-01 : f32
    %37 = vector.broadcast %cst_13 : f32 to vector<8x512xf32>
    %38 = arith.mulf %37, %36 : vector<8x512xf32>
    %39 = arith.maximumf %36, %38 : vector<8x512xf32>
    %cst_14 = arith.constant 1.41421354 : f32
    %40 = vector.broadcast %cst_14 : f32 to vector<8x512xf32>
    %41 = arith.mulf %39, %40 : vector<8x512xf32>
    %c0_15 = arith.constant 0 : index
    %c0_16 = arith.constant 0 : index
    %42 = vector.load %arg3[%c0_15, %c0_16] : memref<10x512xf32, #tpu.memory_space<vmem>>, vector<8x512xf32>
    %cst_17 = arith.constant dense<0.000000e+00> : vector<8x8xf32>
    %43 = tpu.matmul %41, %42, %cst_17 {dimension_numbers = #tpu.dot_dimension_numbers<[1], [1], [0], [0], [0, 0, 1, 0], [], []>} : vector<8x512xf32>, vector<8x512xf32>, vector<8x8xf32> -> vector<8x8xf32>
    %c8_18 = arith.constant 8 : index
    %c0_19 = arith.constant 0 : index
    %44 = vector.load %arg4[%c8_18, %c0_19] : memref<10x128xf32, #tpu.memory_space<vmem>>, vector<1x8xf32>
    %45 = vector.broadcast %44 : vector<1x8xf32> to vector<8x8xf32>
    %46 = arith.addf %43, %45 : vector<8x8xf32>
    %cst_20 = arith.constant 2.000000e-01 : f32
    %47 = vector.broadcast %cst_20 : f32 to vector<8x8xf32>
    %48 = arith.mulf %47, %46 : vector<8x8xf32>
    %49 = arith.maximumf %46, %48 : vector<8x8xf32>
    %cst_21 = arith.constant 1.41421354 : f32
    %50 = vector.broadcast %cst_21 : f32 to vector<8x8xf32>
    %51 = arith.mulf %49, %50 : vector<8x8xf32>
    %c0_22 = arith.constant 0 : index
    %c0_23 = arith.constant 0 : index
    %52 = vector.load %arg4[%c0_22, %c0_23] : memref<10x128xf32, #tpu.memory_space<vmem>>, vector<8x128xf32>
    %c9_24 = arith.constant 9 : index
    %c0_25 = arith.constant 0 : index
    %53 = vector.load %arg4[%c9_24, %c0_25] : memref<10x128xf32, #tpu.memory_space<vmem>>, vector<1x128xf32>
    %cst_26 = arith.constant dense<0.000000e+00> : vector<8x128xf32>
    %54 = tpu.matmul %51, %52, %cst_26 {dimension_numbers = #tpu.dot_dimension_numbers<[1], [0], [0], [1], [0, 0, 1, 1], [], []>} : vector<8x8xf32>, vector<8x128xf32>, vector<8x128xf32> -> vector<8x128xf32>
    %55 = vector.broadcast %53 : vector<1x128xf32> to vector<8x128xf32>
    %56 = arith.addf %54, %55 : vector<8x128xf32>
    %57 = vector.extract_strided_slice %56 {offsets = [0, 0], sizes = [8, 8], strides = [1, 1]} : vector<8x128xf32> to vector<8x8xf32>
    %c0_27 = arith.constant 0 : index
    %c0_28 = arith.constant 0 : index
    %58 = vector.load %arg1[%c0_27, %c0_28] : memref<8x8xf32, #tpu.memory_space<vmem>>, vector<8x8xf32>
    %59 = arith.mulf %57, %58 : vector<8x8xf32>
    %cst_29 = arith.constant dense<0.000000e+00> : vector<8xf32>
    %60 = vector.multi_reduction <add>, %59, %cst_29 [1] : vector<8x8xf32> to vector<8xf32>
    %61 = vector.shape_cast %60 : vector<8xf32> to vector<8x1xf32>
    %c0_30 = arith.constant 0 : index
    %c0_31 = arith.constant 0 : index
    %62 = vector.load %arg5[%c0_30, %c0_31] : memref<8x7xf32, #tpu.memory_space<vmem>>, vector<8x1xf32>
    tpu.vector_store %arg5[%c0_30, %c0_31], %61 {strides = array<i32>} : memref<8x7xf32, #tpu.memory_space<vmem>>, vector<8x1xf32>,
    %63 = vector.extract_strided_slice %56 {offsets = [0, 8], sizes = [8, 6], strides = [1, 1]} : vector<8x128xf32> to vector<8x6xf32>
    %c0_32 = arith.constant 0 : index
    %c1 = arith.constant 1 : index
    %64 = vector.load %arg5[%c0_32, %c1] : memref<8x7xf32, #tpu.memory_space<vmem>>, vector<8x6xf32>
    tpu.vector_store %arg5[%c0_32, %c1], %63 {strides = array<i32>} : memref<8x7xf32, #tpu.memory_space<vmem>>, vector<8x6xf32>,
    return
  }
}

</mosaic_0001>

<llo_original>
// kernel: discriminator_epilogue.1
$region0: #{discriminator_epilogue.1}
  #allocation0 [shape = 'u32[]', space=smem, size = 0x4, offset = 0x4, fixed_abs, tag = 'smem constant byte address 0x4 - core index']
  #allocation1 [shape = 'u32[144,128]{1,0:T(1,128)}', space=vmem, size = 0x12000, scoped, tag = 'internal scratch']
  %s0 = inlined_call_operand.vmem [shape: f32[8,512], index: 0, kind: input, shape index: {}]
  %s1 = inlined_call_operand.vmem [shape: f32[8,8], index: 1, kind: input, shape index: {}]
  %s2 = inlined_call_operand.hbm [shape: bf16[512,512], index: 2, kind: input, shape index: {}]
  %s3 = inlined_call_operand.vmem [shape: f32[10,512], index: 3, kind: input, shape index: {}]
  %s4 = inlined_call_operand.vmem [shape: f32[10,128], index: 4, kind: input, shape index: {}]
  %s5 = inlined_call_operand.vmem [shape: f32[8,7], index: 5, kind: output, shape index: {}]
  %s6 = sld [smem:[#allocation0]]
  $region34: #{discriminator_epilogue.1} parent=0
    _
  %s8 = ssub.s32 1, %s6
  %s9 = scalar_select 0, %s8, %s6
  $region1: #{discriminator_epilogue.1} parent=0
    #allocation2 [shape = 'u8[524288]{0}', space=vmem, size = 0x80000, scoped, tag = 'input window, operand 2, single buffered']
    #allocation3 [shape = 's32[1]{0}', space=sflag, size = 0x4, scoped, tag = 'scoped memory for discriminator_epilogue.1']
    %10 = vsyncpa [#allocation3], 0
    // Predicated region
    $region2: #{discriminator_epilogue.1} parent=1 // pred_check
      _
    $region3: #{discriminator_epilogue.1} parent=1 // pred_check_branch
      %12 = sbr.rel (0) target = $region5
    $region4: #{discriminator_epilogue.1} parent=1 // pred_region
      _
    $region5: #{discriminator_epilogue.1} parent=1 // pred_fallthru
      _
    // Predicated region
    $region6: #{discriminator_epilogue.1} parent=1 // pred_check
      _
    $region7: #{discriminator_epilogue.1} parent=1 // pred_check_branch
      %14 = sbr.rel (0) target = $region9
    $region8: #{discriminator_epilogue.1} parent=1 // pred_region
      _
    $region9: #{discriminator_epilogue.1} parent=1 // pred_fallthru
      _
    // Predicated region
    $region10: #{discriminator_epilogue.1} parent=1 // pred_check
      _
    $region11: #{discriminator_epilogue.1} parent=1 // pred_check_branch
      %16 = sbr.rel (0) target = $region13
    $region12: #{discriminator_epilogue.1} parent=1 // pred_region
      %s18 = ssub.s32 16384, 16384
      %19 = vsyncadd [#allocation3], %s18
      %s20 = sshll.u32 [#allocation2], 4
      %s21 = int_to_ptr.vmem [resolvable:$true] %s20
      %26 = dma.hbm_to_vmem [thread:$0]  %s2, 16384, %s21, [#allocation3], 256, 256, 16
    $region13: #{discriminator_epilogue.1} parent=1 // pred_fallthru
      _
    // Predicated region
    $region14: #{discriminator_epilogue.1} parent=1 // pred_check
      _
    $region15: #{discriminator_epilogue.1} parent=1 // pred_check_branch
      %28 = sbr.rel (0) target = $region17
    $region16: #{discriminator_epilogue.1} parent=1 // pred_region
      _
    $region17: #{discriminator_epilogue.1} parent=1 // pred_fallthru
      _
    // Predicated region
    $region18: #{discriminator_epilogue.1} parent=1 // pred_check
      _
    $region19: #{discriminator_epilogue.1} parent=1 // pred_check_branch
      %30 = sbr.rel (0) target = $region21
    $region20: #{discriminator_epilogue.1} parent=1 // pred_region
      _
    $region21: #{discriminator_epilogue.1} parent=1 // pred_fallthru
      _
    // Predicated region
    $region22: #{discriminator_epilogue.1} parent=1 // pred_check
      _
    $region23: #{discriminator_epilogue.1} parent=1 // pred_check_branch
      %32 = sbr.rel (0) target = $region25
    $region24: #{discriminator_epilogue.1} parent=1 // pred_region
      %33 = dma.done [#allocation3], 16384
    $region25: #{discriminator_epilogue.1} parent=1 // pred_fallthru
      _
    %v34 = vld [vmem:[%s0] sm:$0xff]
    %v35 = vld [vmem:[%s0 + $0x8] sm:$0xff]
    %v36 = vld [vmem:[%s0 + $0x10] sm:$0xff]
    %v37 = vld [vmem:[%s0 + $0x18] sm:$0xff]
    %v38 = vrot.slane %v34, 6
    %v39 = vrot.slane %v35, 6
    %v40 = vrot.slane %v36, 6
    %v41 = vrot.slane %v37, 6
    %v42 = vadd.f32 %v34, %v38
    %v43 = vadd.f32 %v35, %v39
    %v44 = vadd.f32 %v36, %v40
    %v45 = vadd.f32 %v37, %v41
    %v46 = vrot.slane %v34, 4
    %v47 = vrot.slane %v35, 4
    %v48 = vrot.slane %v36, 4
    %v49 = vrot.slane %v37, 4
    %v50 = vadd.f32 %v42, %v46
    %v51 = vadd.f32 %v43, %v47
    %v52 = vadd.f32 %v44, %v48
    %v53 = vadd.f32 %v45, %v49
    %v54 = vrot.slane %v34, 2
    %v55 = vrot.slane %v35, 2
    %v56 = vrot.slane %v36, 2
    %v57 = vrot.slane %v37, 2
    %v58 = vadd.f32 %v50, %v54
    %v59 = vadd.f32 %v51, %v55
    %v60 = vadd.f32 %v52, %v56
    %v61 = vadd.f32 %v53, %v57
    %v62 = vmul.f32 %v58, 0.25
    %v63 = vmul.f32 %v59, 0.25
    %v64 = vmul.f32 %v60, 0.25
    %v65 = vmul.f32 %v61, 0.25
    %v66 = vsub.f32 %v34, %v62
    %v67 = vsub.f32 %v35, %v63
    %v68 = vsub.f32 %v36, %v64
    %v69 = vsub.f32 %v37, %v65
    %v70 = vmul.f32 %v66, %v66
    %v71 = vmul.f32 %v67, %v67
    %v72 = vmul.f32 %v68, %v68
    %v73 = vmul.f32 %v69, %v69
    %v74 = vrot.slane %v70, 6
    %v75 = vrot.slane %v71, 6
    %v76 = vrot.slane %v72, 6
    %v77 = vrot.slane %v73, 6
    %v78 = vadd.f32 %v70, %v74
    %v79 = vadd.f32 %v71, %v75
    %v80 = vadd.f32 %v72, %v76
    %v81 = vadd.f32 %v73, %v77
    %v82 = vrot.slane %v70, 4
    %v83 = vrot.slane %v71, 4
    %v84 = vrot.slane %v72, 4
    %v85 = vrot.slane %v73, 4
    %v86 = vadd.f32 %v78, %v82
    %v87 = vadd.f32 %v79, %v83
    %v88 = vadd.f32 %v80, %v84
    %v89 = vadd.f32 %v81, %v85
    %v90 = vrot.slane %v70, 2
    %v91 = vrot.slane %v71, 2
    %v92 = vrot.slane %v72, 2
    %v93 = vrot.slane %v73, 2
    %v94 = vadd.f32 %v86, %v90
    %v95 = vadd.f32 %v87, %v91
    %v96 = vadd.f32 %v88, %v92
    %v97 = vadd.f32 %v89, %v93
    %v98 = vmul.f32 %v94, 0.25
    %v99 = vmul.f32 %v95, 0.25
    %v100 = vmul.f32 %v96, 0.25
    %v101 = vmul.f32 %v97, 0.25
    %v102 = vadd.f32 %v98, 1e-08
    %v103 = vadd.f32 %v99, 1e-08
    %v104 = vadd.f32 %v100, 1e-08
    %v105 = vadd.f32 %v101, 1e-08
    %v106 = vrsqrt.pop %v102
    %v107 = vmul.f32 %v102, %v106
    %vm108 = vcmp.eq.f32.partialorder %v102, inf
    %v109 = vsel %vm108, %v102, %v107
    %vm110 = vcmp.eq.f32.partialorder %v102, 0.0
    %v111 = vand.u32 %v102, 2147483648
    %v112 = vsel %vm110, %v111, %v109
    %v113 = vrsqrt.pop %v103
    %v114 = vmul.f32 %v103, %v113
    %vm115 = vcmp.eq.f32.partialorder %v103, inf
    %v116 = vsel %vm115, %v103, %v114
    %vm117 = vcmp.eq.f32.partialorder %v103, 0.0
    %v118 = vand.u32 %v103, 2147483648
    %v119 = vsel %vm117, %v118, %v116
    %v120 = vrsqrt.pop %v104
    %v121 = vmul.f32 %v104, %v120
    %vm122 = vcmp.eq.f32.partialorder %v104, inf
    %v123 = vsel %vm122, %v104, %v121
    %vm124 = vcmp.eq.f32.partialorder %v104, 0.0
    %v125 = vand.u32 %v104, 2147483648
    %v126 = vsel %vm124, %v125, %v123
    %v127 = vrsqrt.pop %v105
    %v128 = vmul.f32 %v105, %v127
    %vm129 = vcmp.eq.f32.partialorder %v105, inf
    %v130 = vsel %vm129, %v105, %v128
    %vm131 = vcmp.eq.f32.partialorder %v105, 0.0
    %v132 = vand.u32 %v105, 2147483648
    %v133 = vsel %vm131, %v132, %v130
    %v134 = vadd.f32 %v112, %v119
    %v135 = vadd.f32 %v134, %v126
    %v136 = vadd.f32 %v135, %v133
    %137 = vadd.xlane.f32.xlu0 %v136
    %v138 = vpop.xlane.xlu0 %137
    %v139 = vrcp.pop 512.0
    %v140 = vmul.f32 %v138, %v139
    %s141 = scalar_lea.vmem %s3, 32
    %v142 = vld [vmem:[%s141] ss:$8 sm:$0xf]
    %s143 = scalar_lea.vmem %s3, 33
    %v144 = vld [vmem:[%s143] ss:$8 sm:$0xf]
    %v145 = vpack.c.bf16 %v34, %v34
    %v146 = vpack.c.bf16 %v35, %v35
    %v147 = vpack.c.bf16 %v36, %v36
    %v148 = vpack.c.bf16 %v37, %v37
    %v149 = vld [vmem:[#allocation2] sm:$0xff]
    %v150 = vld [vmem:[#allocation2 + $0x8] sm:$0xff]
    %v151 = vld [vmem:[#allocation2 + $0x10] sm:$0xff]
    %v152 = vld [vmem:[#allocation2 + $0x18] sm:$0xff]
    %v153 = vld [vmem:[#allocation2 + $0x20] sm:$0xff]
    %v154 = vld [vmem:[#allocation2 + $0x28] sm:$0xff]
    %v155 = vld [vmem:[#allocation2 + $0x30] sm:$0xff]
    %v156 = vld [vmem:[#allocation2 + $0x38] sm:$0xff]
    %v157 = vld [vmem:[#allocation2 + $0x40] sm:$0xff]
    %v158 = vld [vmem:[#allocation2 + $0x48] sm:$0xff]
    %v159 = vld [vmem:[#allocation2 + $0x50] sm:$0xff]
    %v160 = vld [vmem:[#allocation2 + $0x58] sm:$0xff]
    %v161 = vld [vmem:[#allocation2 + $0x60] sm:$0xff]
    %v162 = vld [vmem:[#allocation2 + $0x68] sm:$0xff]
    %v163 = vld [vmem:[#allocation2 + $0x70] sm:$0xff]
    %v164 = vld [vmem:[#allocation2 + $0x78] sm:$0xff]
    %v165 = vld [vmem:[#allocation2 + $0x80] sm:$0xff]
    %v166 = vld [vmem:[#allocation2 + $0x88] sm:$0xff]
    %v167 = vld [vmem:[#allocation2 + $0x90] sm:$0xff]
    %v168 = vld [vmem:[#allocation2 + $0x98] sm:$0xff]
    %v169 = vld [vmem:[#allocation2 + $0xa0] sm:$0xff]
    %v170 = vld [vmem:[#allocation2 + $0xa8] sm:$0xff]
    %v171 = vld [vmem:[#allocation2 + $0xb0] sm:$0xff]
    %v172 = vld [vmem:[#allocation2 + $0xb8] sm:$0xff]
    %v173 = vld [vmem:[#allocation2 + $0xc0] sm:$0xff]
    %v174 = vld [vmem:[#allocation2 + $0xc8] sm:$0xff]
    %v175 = vld [vmem:[#allocation2 + $0xd0] sm:$0xff]
    %v176 = vld [vmem:[#allocation2 + $0xd8] sm:$0xff]
    %v177 = vld [vmem:[#allocation2 + $0xe0] sm:$0xff]
    %v178 = vld [vmem:[#allocation2 + $0xe8] sm:$0xff]
    %v179 = vld [vmem:[#allocation2 + $0xf0] sm:$0xff]
    %v180 = vld [vmem:[#allocation2 + $0xf8] sm:$0xff]
    %v181 = vld [vmem:[#allocation2 + $0x100] sm:$0xff]
    %v182 = vld [vmem:[#allocation2 + $0x108] sm:$0xff]
    %v183 = vld [vmem:[#allocation2 + $0x110] sm:$0xff]
    %v184 = vld [vmem:[#allocation2 + $0x118] sm:$0xff]
    %v185 = vld [vmem:[#allocation2 + $0x120] sm:$0xff]
    %v186 = vld [vmem:[#allocation2 + $0x128] sm:$0xff]
    %v187 = vld [vmem:[#allocation2 + $0x130] sm:$0xff]
    %v188 = vld [vmem:[#allocation2 + $0x138] sm:$0xff]
    %v189 = vld [vmem:[#allocation2 + $0x140] sm:$0xff]
    %v190 = vld [vmem:[#allocation2 + $0x148] sm:$0xff]
    %v191 = vld [vmem:[#allocation2 + $0x150] sm:$0xff]
    %v192 = vld [vmem:[#allocation2 + $0x158] sm:$0xff]
    %v193 = vld [vmem:[#allocation2 + $0x160] sm:$0xff]
    %v194 = vld [vmem:[#allocation2 + $0x168] sm:$0xff]
    %v195 = vld [vmem:[#allocation2 + $0x170] sm:$0xff]
    %v196 = vld [vmem:[#allocation2 + $0x178] sm:$0xff]
    %v197 = vld [vmem:[#allocation2 + $0x180] sm:$0xff]
    %v198 = vld [vmem:[#allocation2 + $0x188] sm:$0xff]
    %v199 = vld [vmem:[#allocation2 + $0x190] sm:$0xff]
    %v200 = vld [vmem:[#allocation2 + $0x198] sm:$0xff]
    %v201 = vld [vmem:[#allocation2 + $0x1a0] sm:$0xff]
    %v202 = vld [vmem:[#allocation2 + $0x1a8] sm:$0xff]
    %v203 = vld [vmem:[#allocation2 + $0x1b0] sm:$0xff]
    %v204 = vld [vmem:[#allocation2 + $0x1b8] sm:$0xff]
    %v205 = vld [vmem:[#allocation2 + $0x1c0] sm:$0xff]
    %v206 = vld [vmem:[#allocation2 + $0x1c8] sm:$0xff]
    %v207 = vld [vmem:[#allocation2 + $0x1d0] sm:$0xff]
    %v208 = vld [vmem:[#allocation2 + $0x1d8] sm:$0xff]
    %v209 = vld [vmem:[#allocation2 + $0x1e0] sm:$0xff]
    %v210 = vld [vmem:[#allocation2 + $0x1e8] sm:$0xff]
    %v211 = vld [vmem:[#allocation2 + $0x1f0] sm:$0xff]
    %v212 = vld [vmem:[#allocation2 + $0x1f8] sm:$0xff]
    %v213 = vld [vmem:[#allocation2 + $0x200] sm:$0xff]
    %v214 = vld [vmem:[#allocation2 + $0x208] sm:$0xff]
    %v215 = vld [vmem:[#allocation2 + $0x210] sm:$0xff]
    %v216 = vld [vmem:[#allocation2 + $0x218] sm:$0xff]
    %v217 = vld [vmem:[#allocation2 + $0x220] sm:$0xff]
    %v218 = vld [vmem:[#allocation2 + $0x228] sm:$0xff]
    %v219 = vld [vmem:[#allocation2 + $0x230] sm:$0xff]
    %v220 = vld [vmem:[#allocation2 + $0x238] sm:$0xff]
    %v221 = vld [vmem:[#allocation2 + $0x240] sm:$0xff]
    %v222 = vld [vmem:[#allocation2 + $0x248] sm:$0xff]
    %v223 = vld [vmem:[#allocation2 + $0x250] sm:$0xff]
    %v224 = vld [vmem:[#allocation2 + $0x258] sm:$0xff]
    %v225 = vld [vmem:[#allocation2 + $0x260] sm:$0xff]
    %v226 = vld [vmem:[#allocation2 + $0x268] sm:$0xff]
    %v227 = vld [vmem:[#allocation2 + $0x270] sm:$0xff]
    %v228 = vld [vmem:[#allocation2 + $0x278] sm:$0xff]
    %v229 = vld [vmem:[#allocation2 + $0x280] sm:$0xff]
    %v230 = vld [vmem:[#allocation2 + $0x288] sm:$0xff]
    %v231 = vld [vmem:[#allocation2 + $0x290] sm:$0xff]
    %v232 = vld [vmem:[#allocation2 + $0x298] sm:$0xff]
    %v233 = vld [vmem:[#allocation2 + $0x2a0] sm:$0xff]
    %v234 = vld [vmem:[#allocation2 + $0x2a8] sm:$0xff]
    %v235 = vld [vmem:[#allocation2 + $0x2b0] sm:$0xff]
    %v236 = vld [vmem:[#allocation2 + $0x2b8] sm:$0xff]
    %v237 = vld [vmem:[#allocation2 + $0x2c0] sm:$0xff]
    %v238 = vld [vmem:[#allocation2 + $0x2c8] sm:$0xff]
    %v239 = vld [vmem:[#allocation2 + $0x2d0] sm:$0xff]
    %v240 = vld [vmem:[#allocation2 + $0x2d8] sm:$0xff]
    %v241 = vld [vmem:[#allocation2 + $0x2e0] sm:$0xff]
    %v242 = vld [vmem:[#allocation2 + $0x2e8] sm:$0xff]
    %v243 = vld [vmem:[#allocation2 + $0x2f0] sm:$0xff]
    %v244 = vld [vmem:[#allocation2 + $0x2f8] sm:$0xff]
    %v245 = vld [vmem:[#allocation2 + $0x300] sm:$0xff]
    %v246 = vld [vmem:[#allocation2 + $0x308] sm:$0xff]
    %v247 = vld [vmem:[#allocation2 + $0x310] sm:$0xff]
    %v248 = vld [vmem:[#allocation2 + $0x318] sm:$0xff]
    %v249 = vld [vmem:[#allocation2 + $0x320] sm:$0xff]
    %v250 = vld [vmem:[#allocation2 + $0x328] sm:$0xff]
    %v251 = vld [vmem:[#allocation2 + $0x330] sm:$0xff]
    %v252 = vld [vmem:[#allocation2 + $0x338] sm:$0xff]
    %v253 = vld [vmem:[#allocation2 + $0x340] sm:$0xff]
    %v254 = vld [vmem:[#allocation2 + $0x348] sm:$0xff]
    %v255 = vld [vmem:[#allocation2 + $0x350] sm:$0xff]
    %v256 = vld [vmem:[#allocation2 + $0x358] sm:$0xff]
    %v257 = vld [vmem:[#allocation2 + $0x360] sm:$0xff]
    %v258 = vld [vmem:[#allocation2 + $0x368] sm:$0xff]
    %v259 = vld [vmem:[#allocation2 + $0x370] sm:$0xff]
    %v260 = vld [vmem:[#allocation2 + $0x378] sm:$0xff]
    %v261 = vld [vmem:[#allocation2 + $0x380] sm:$0xff]
    %v262 = vld [vmem:[#allocation2 + $0x388] sm:$0xff]
    %v263 = vld [vmem:[#allocation2 + $0x390] sm:$0xff]
    %v264 = vld [vmem:[#allocation2 + $0x398] sm:$0xff]
    %v265 = vld [vmem:[#allocation2 + $0x3a0] sm:$0xff]
    %v266 = vld [vmem:[#allocation2 + $0x3a8] sm:$0xff]
    %v267 = vld [vmem:[#allocation2 + $0x3b0] sm:$0xff]
    %v268 = vld [vmem:[#allocation2 + $0x3b8] sm:$0xff]
    %v269 = vld [vmem:[#allocation2 + $0x3c0] sm:$0xff]
    %v270 = vld [vmem:[#allocation2 + $0x3c8] sm:$0xff]
    %v271 = vld [vmem:[#allocation2 + $0x3d0] sm:$0xff]
    %v272 = vld [vmem:[#allocation2 + $0x3d8] sm:$0xff]
    %v273 = vld [vmem:[#allocation2 + $0x3e0] sm:$0xff]
    %v274 = vld [vmem:[#allocation2 + $0x3e8] sm:$0xff]
    %v275 = vld [vmem:[#allocation2 + $0x3f0] sm:$0xff]
    %v276 = vld [vmem:[#allocation2 + $0x3f8] sm:$0xff]
    %v278 = vlaneseq
    %v279 = vshrl.u32 %v278, 7
    %v280 = vsub.s32 0, %v279
    %v281 = vrot.slane %v142, %v280
    %v282 = vlaneseq
    %v283 = vshrl.u32 %v282, 7
    %v284 = vsub.s32 1, %v283
    %v285 = vrot.slane %v142, %v284
    %v286 = vlaneseq
    %v287 = vshrl.u32 %v286, 7
    %v288 = vsub.s32 2, %v287
    %v289 = vrot.slane %v142, %v288
    %v290 = vlaneseq
    %v291 = vshrl.u32 %v290, 7
    %v292 = vsub.s32 3, %v291
    %v293 = vrot.slane %v142, %v292
    %v426 = vunpack.c.l.b16 %v149
    %v427 = vunpack.c.h.b16 %v149
    %v428 = vunpack.c.l.b16 %v150
    %v429 = vunpack.c.h.b16 %v150
    %v430 = vunpack.c.l.b16 %v151
    %v431 = vunpack.c.h.b16 %v151
    %v432 = vunpack.c.l.b16 %v152
    %v433 = vunpack.c.h.b16 %v152
    %v434 = vunpack.c.l.b16 %v153
    %v435 = vunpack.c.h.b16 %v153
    %v436 = vunpack.c.l.b16 %v154
    %v437 = vunpack.c.h.b16 %v154
    %v438 = vunpack.c.l.b16 %v155
    %v439 = vunpack.c.h.b16 %v155
    %v440 = vunpack.c.l.b16 %v156
    %v441 = vunpack.c.h.b16 %v156
    %v442 = vunpack.c.l.b16 %v157
    %v443 = vunpack.c.h.b16 %v157
    %v444 = vunpack.c.l.b16 %v158
    %v445 = vunpack.c.h.b16 %v158
    %v446 = vunpack.c.l.b16 %v159
    %v447 = vunpack.c.h.b16 %v159
    %v448 = vunpack.c.l.b16 %v160
    %v449 = vunpack.c.h.b16 %v160
    %v450 = vunpack.c.l.b16 %v161
    %v451 = vunpack.c.h.b16 %v161
    %v452 = vunpack.c.l.b16 %v162
    %v453 = vunpack.c.h.b16 %v162
    %v454 = vunpack.c.l.b16 %v163
    %v455 = vunpack.c.h.b16 %v163
    %v456 = vunpack.c.l.b16 %v164
    %v457 = vunpack.c.h.b16 %v164
    %v458 = vunpack.c.l.b16 %v165
    %v459 = vunpack.c.h.b16 %v165
    %v460 = vunpack.c.l.b16 %v166
    %v461 = vunpack.c.h.b16 %v166
    %v462 = vunpack.c.l.b16 %v167
    %v463 = vunpack.c.h.b16 %v167
    %v464 = vunpack.c.l.b16 %v168
    %v465 = vunpack.c.h.b16 %v168
    %v466 = vunpack.c.l.b16 %v169
    %v467 = vunpack.c.h.b16 %v169
    %v468 = vunpack.c.l.b16 %v170
    %v469 = vunpack.c.h.b16 %v170
    %v470 = vunpack.c.l.b16 %v171
    %v471 = vunpack.c.h.b16 %v171
    %v472 = vunpack.c.l.b16 %v172
    %v473 = vunpack.c.h.b16 %v172
    %v474 = vunpack.c.l.b16 %v173
    %v475 = vunpack.c.h.b16 %v173
    %v476 = vunpack.c.l.b16 %v174
    %v477 = vunpack.c.h.b16 %v174
    %v478 = vunpack.c.l.b16 %v175
    %v479 = vunpack.c.h.b16 %v175
    %v480 = vunpack.c.l.b16 %v176
    %v481 = vunpack.c.h.b16 %v176
    %v482 = vunpack.c.l.b16 %v177
    %v483 = vunpack.c.h.b16 %v177
    %v484 = vunpack.c.l.b16 %v178
    %v485 = vunpack.c.h.b16 %v178
    %v486 = vunpack.c.l.b16 %v179
    %v487 = vunpack.c.h.b16 %v179
    %v488 = vunpack.c.l.b16 %v180
    %v489 = vunpack.c.h.b16 %v180
    %v490 = vunpack.c.l.b16 %v181
    %v491 = vunpack.c.h.b16 %v181
    %v492 = vunpack.c.l.b16 %v182
    %v493 = vunpack.c.h.b16 %v182
    %v494 = vunpack.c.l.b16 %v183
    %v495 = vunpack.c.h.b16 %v183
    %v496 = vunpack.c.l.b16 %v184
    %v497 = vunpack.c.h.b16 %v184
    %v498 = vunpack.c.l.b16 %v185
    %v499 = vunpack.c.h.b16 %v185
    %v500 = vunpack.c.l.b16 %v186
    %v501 = vunpack.c.h.b16 %v186
    %v502 = vunpack.c.l.b16 %v187
    %v503 = vunpack.c.h.b16 %v187
    %v504 = vunpack.c.l.b16 %v188
    %v505 = vunpack.c.h.b16 %v188
    %v506 = vunpack.c.l.b16 %v189
    %v507 = vunpack.c.h.b16 %v189
    %v508 = vunpack.c.l.b16 %v190
    %v509 = vunpack.c.h.b16 %v190
    %v510 = vunpack.c.l.b16 %v191
    %v511 = vunpack.c.h.b16 %v191
    %v512 = vunpack.c.l.b16 %v192
    %v513 = vunpack.c.h.b16 %v192
    %v514 = vunpack.c.l.b16 %v193
    %v515 = vunpack.c.h.b16 %v193
    %v516 = vunpack.c.l.b16 %v194
    %v517 = vunpack.c.h.b16 %v194
    %v518 = vunpack.c.l.b16 %v195
    %v519 = vunpack.c.h.b16 %v195
    %v520 = vunpack.c.l.b16 %v196
    %v521 = vunpack.c.h.b16 %v196
    %v522 = vunpack.c.l.b16 %v197
    %v523 = vunpack.c.h.b16 %v197
    %v524 = vunpack.c.l.b16 %v198
    %v525 = vunpack.c.h.b16 %v198
    %v526 = vunpack.c.l.b16 %v199
    %v527 = vunpack.c.h.b16 %v199
    %v528 = vunpack.c.l.b16 %v200
    %v529 = vunpack.c.h.b16 %v200
    %v530 = vunpack.c.l.b16 %v201
    %v531 = vunpack.c.h.b16 %v201
    %v532 = vunpack.c.l.b16 %v202
    %v533 = vunpack.c.h.b16 %v202
    %v534 = vunpack.c.l.b16 %v203
    %v535 = vunpack.c.h.b16 %v203
    %v536 = vunpack.c.l.b16 %v204
    %v537 = vunpack.c.h.b16 %v204
    %v538 = vunpack.c.l.b16 %v205
    %v539 = vunpack.c.h.b16 %v205
    %v540 = vunpack.c.l.b16 %v206
    %v541 = vunpack.c.h.b16 %v206
    %v542 = vunpack.c.l.b16 %v207
    %v543 = vunpack.c.h.b16 %v207
    %v544 = vunpack.c.l.b16 %v208
    %v545 = vunpack.c.h.b16 %v208
    %v546 = vunpack.c.l.b16 %v209
    %v547 = vunpack.c.h.b16 %v209
    %v548 = vunpack.c.l.b16 %v210
    %v549 = vunpack.c.h.b16 %v210
    %v550 = vunpack.c.l.b16 %v211
    %v551 = vunpack.c.h.b16 %v211
    %v552 = vunpack.c.l.b16 %v212
    %v553 = vunpack.c.h.b16 %v212
    %v554 = vunpack.c.l.b16 %v213
    %v555 = vunpack.c.h.b16 %v213
    %v556 = vunpack.c.l.b16 %v214
    %v557 = vunpack.c.h.b16 %v214
    %v558 = vunpack.c.l.b16 %v215
    %v559 = vunpack.c.h.b16 %v215
    %v560 = vunpack.c.l.b16 %v216
    %v561 = vunpack.c.h.b16 %v216
    %v562 = vunpack.c.l.b16 %v217
    %v563 = vunpack.c.h.b16 %v217
    %v564 = vunpack.c.l.b16 %v218
    %v565 = vunpack.c.h.b16 %v218
    %v566 = vunpack.c.l.b16 %v219
    %v567 = vunpack.c.h.b16 %v219
    %v568 = vunpack.c.l.b16 %v220
    %v569 = vunpack.c.h.b16 %v220
    %v570 = vunpack.c.l.b16 %v221
    %v571 = vunpack.c.h.b16 %v221
    %v572 = vunpack.c.l.b16 %v222
    %v573 = vunpack.c.h.b16 %v222
    %v574 = vunpack.c.l.b16 %v223
    %v575 = vunpack.c.h.b16 %v223
    %v576 = vunpack.c.l.b16 %v224
    %v577 = vunpack.c.h.b16 %v224
    %v578 = vunpack.c.l.b16 %v225
    %v579 = vunpack.c.h.b16 %v225
    %v580 = vunpack.c.l.b16 %v226
    %v581 = vunpack.c.h.b16 %v226
    %v582 = vunpack.c.l.b16 %v227
    %v583 = vunpack.c.h.b16 %v227
    %v584 = vunpack.c.l.b16 %v228
    %v585 = vunpack.c.h.b16 %v228
    %v586 = vunpack.c.l.b16 %v229
    %v587 = vunpack.c.h.b16 %v229
    %v588 = vunpack.c.l.b16 %v230
    %v589 = vunpack.c.h.b16 %v230
    %v590 = vunpack.c.l.b16 %v231
    %v591 = vunpack.c.h.b16 %v231
    %v592 = vunpack.c.l.b16 %v232
    %v593 = vunpack.c.h.b16 %v232
    %v594 = vunpack.c.l.b16 %v233
    %v595 = vunpack.c.h.b16 %v233
    %v596 = vunpack.c.l.b16 %v234
    %v597 = vunpack.c.h.b16 %v234
    %v598 = vunpack.c.l.b16 %v235
    %v599 = vunpack.c.h.b16 %v235
    %v600 = vunpack.c.l.b16 %v236
    %v601 = vunpack.c.h.b16 %v236
    %v602 = vunpack.c.l.b16 %v237
    %v603 = vunpack.c.h.b16 %v237
    %v604 = vunpack.c.l.b16 %v238
    %v605 = vunpack.c.h.b16 %v238
    %v606 = vunpack.c.l.b16 %v239
    %v607 = vunpack.c.h.b16 %v239
    %v608 = vunpack.c.l.b16 %v240
    %v609 = vunpack.c.h.b16 %v240
    %v610 = vunpack.c.l.b16 %v241
    %v611 = vunpack.c.h.b16 %v241
    %v612 = vunpack.c.l.b16 %v242
    %v613 = vunpack.c.h.b16 %v242
    %v614 = vunpack.c.l.b16 %v243
    %v615 = vunpack.c.h.b16 %v243
    %v616 = vunpack.c.l.b16 %v244
    %v617 = vunpack.c.h.b16 %v244
    %v618 = vunpack.c.l.b16 %v245
    %v619 = vunpack.c.h.b16 %v245
    %v620 = vunpack.c.l.b16 %v246
    %v621 = vunpack.c.h.b16 %v246
    %v622 = vunpack.c.l.b16 %v247
    %v623 = vunpack.c.h.b16 %v247
    %v624 = vunpack.c.l.b16 %v248
    %v625 = vunpack.c.h.b16 %v248
    %v626 = vunpack.c.l.b16 %v249
    %v627 = vunpack.c.h.b16 %v249
    %v628 = vunpack.c.l.b16 %v250
    %v629 = vunpack.c.h.b16 %v250
    %v630 = vunpack.c.l.b16 %v251
    %v631 = vunpack.c.h.b16 %v251
    %v632 = vunpack.c.l.b16 %v252
    %v633 = vunpack.c.h.b16 %v252
    %v634 = vunpack.c.l.b16 %v253
    %v635 = vunpack.c.h.b16 %v253
    %v636 = vunpack.c.l.b16 %v254
    %v637 = vunpack.c.h.b16 %v254
    %v638 = vunpack.c.l.b16 %v255
    %v639 = vunpack.c.h.b16 %v255
    %v640 = vunpack.c.l.b16 %v256
    %v641 = vunpack.c.h.b16 %v256
    %v642 = vunpack.c.l.b16 %v257
    %v643 = vunpack.c.h.b16 %v257
    %v644 = vunpack.c.l.b16 %v258
    %v645 = vunpack.c.h.b16 %v258
    %v646 = vunpack.c.l.b16 %v259
    %v647 = vunpack.c.h.b16 %v259
    %v648 = vunpack.c.l.b16 %v260
    %v649 = vunpack.c.h.b16 %v260
    %v650 = vunpack.c.l.b16 %v261
    %v651 = vunpack.c.h.b16 %v261
    %v652 = vunpack.c.l.b16 %v262
    %v653 = vunpack.c.h.b16 %v262
    %v654 = vunpack.c.l.b16 %v263
    %v655 = vunpack.c.h.b16 %v263
    %v656 = vunpack.c.l.b16 %v264
    %v657 = vunpack.c.h.b16 %v264
    %v658 = vunpack.c.l.b16 %v265
    %v659 = vunpack.c.h.b16 %v265
    %v660 = vunpack.c.l.b16 %v266
    %v661 = vunpack.c.h.b16 %v266
    %v662 = vunpack.c.l.b16 %v267
    %v663 = vunpack.c.h.b16 %v267
    %v664 = vunpack.c.l.b16 %v268
    %v665 = vunpack.c.h.b16 %v268
    %v666 = vunpack.c.l.b16 %v269
    %v667 = vunpack.c.h.b16 %v269
    %v668 = vunpack.c.l.b16 %v270
    %v669 = vunpack.c.h.b16 %v270
    %v670 = vunpack.c.l.b16 %v271
    %v671 = vunpack.c.h.b16 %v271
    %v672 = vunpack.c.l.b16 %v272
    %v673 = vunpack.c.h.b16 %v272
    %v674 = vunpack.c.l.b16 %v273
    %v675 = vunpack.c.h.b16 %v273
    %v676 = vunpack.c.l.b16 %v274
    %v677 = vunpack.c.h.b16 %v274
    %v678 = vunpack.c.l.b16 %v275
    %v679 = vunpack.c.h.b16 %v275
    %v680 = vunpack.c.l.b16 %v276
    %v681 = vunpack.c.h.b16 %v276
    %v682 = vpack.c.b16 %v430, %v426
    %v683 = vpack.c.b16 %v431, %v427
    %v684 = vpack.c.b16 %v432, %v428
    %v685 = vpack.c.b16 %v433, %v429
    %v686 = vpack.c.b16 %v438, %v434
    %v687 = vpack.c.b16 %v439, %v435
    %v688 = vpack.c.b16 %v440, %v436
    %v689 = vpack.c.b16 %v441, %v437
    %v690 = vpack.c.b16 %v446, %v442
    %v691 = vpack.c.b16 %v447, %v443
    %v692 = vpack.c.b16 %v448, %v444
    %v693 = vpack.c.b16 %v449, %v445
    %v694 = vpack.c.b16 %v454, %v450
    %v695 = vpack.c.b16 %v455, %v451
    %v696 = vpack.c.b16 %v456, %v452
    %v697 = vpack.c.b16 %v457, %v453
    %v698 = vpack.c.b16 %v462, %v458
    %v699 = vpack.c.b16 %v463, %v459
    %v700 = vpack.c.b16 %v464, %v460
    %v701 = vpack.c.b16 %v465, %v461
    %v702 = vpack.c.b16 %v470, %v466
    %v703 = vpack.c.b16 %v471, %v467
    %v704 = vpack.c.b16 %v472, %v468
    %v705 = vpack.c.b16 %v473, %v469
    %v706 = vpack.c.b16 %v478, %v474
    %v707 = vpack.c.b16 %v479, %v475
    %v708 = vpack.c.b16 %v480, %v476
    %v709 = vpack.c.b16 %v481, %v477
    %v710 = vpack.c.b16 %v486, %v482
    %v711 = vpack.c.b16 %v487, %v483
    %v712 = vpack.c.b16 %v488, %v484
    %v713 = vpack.c.b16 %v489, %v485
    %v714 = vpack.c.b16 %v494, %v490
    %v715 = vpack.c.b16 %v495, %v491
    %v716 = vpack.c.b16 %v496, %v492
    %v717 = vpack.c.b16 %v497, %v493
    %v718 = vpack.c.b16 %v502, %v498
    %v719 = vpack.c.b16 %v503, %v499
    %v720 = vpack.c.b16 %v504, %v500
    %v721 = vpack.c.b16 %v505, %v501
    %v722 = vpack.c.b16 %v510, %v506
    %v723 = vpack.c.b16 %v511, %v507
    %v724 = vpack.c.b16 %v512, %v508
    %v725 = vpack.c.b16 %v513, %v509
    %v726 = vpack.c.b16 %v518, %v514
    %v727 = vpack.c.b16 %v519, %v515
    %v728 = vpack.c.b16 %v520, %v516
    %v729 = vpack.c.b16 %v521, %v517
    %v730 = vpack.c.b16 %v526, %v522
    %v731 = vpack.c.b16 %v527, %v523
    %v732 = vpack.c.b16 %v528, %v524
    %v733 = vpack.c.b16 %v529, %v525
    %v734 = vpack.c.b16 %v534, %v530
    %v735 = vpack.c.b16 %v535, %v531
    %v736 = vpack.c.b16 %v536, %v532
    %v737 = vpack.c.b16 %v537, %v533
    %v738 = vpack.c.b16 %v542, %v538
    %v739 = vpack.c.b16 %v543, %v539
    %v740 = vpack.c.b16 %v544, %v540
    %v741 = vpack.c.b16 %v545, %v541
    %v742 = vpack.c.b16 %v550, %v546
    %v743 = vpack.c.b16 %v551, %v547
    %v744 = vpack.c.b16 %v552, %v548
    %v745 = vpack.c.b16 %v553, %v549
    %v746 = vpack.c.b16 %v558, %v554
    %v747 = vpack.c.b16 %v559, %v555
    %v748 = vpack.c.b16 %v560, %v556
    %v749 = vpack.c.b16 %v561, %v557
    %v750 = vpack.c.b16 %v566, %v562
    %v751 = vpack.c.b16 %v567, %v563
    %v752 = vpack.c.b16 %v568, %v564
    %v753 = vpack.c.b16 %v569, %v565
    %v754 = vpack.c.b16 %v574, %v570
    %v755 = vpack.c.b16 %v575, %v571
    %v756 = vpack.c.b16 %v576, %v572
    %v757 = vpack.c.b16 %v577, %v573
    %v758 = vpack.c.b16 %v582, %v578
    %v759 = vpack.c.b16 %v583, %v579
    %v760 = vpack.c.b16 %v584, %v580
    %v761 = vpack.c.b16 %v585, %v581
    %v762 = vpack.c.b16 %v590, %v586
    %v763 = vpack.c.b16 %v591, %v587
    %v764 = vpack.c.b16 %v592, %v588
    %v765 = vpack.c.b16 %v593, %v589
    %v766 = vpack.c.b16 %v598, %v594
    %v767 = vpack.c.b16 %v599, %v595
    %v768 = vpack.c.b16 %v600, %v596
    %v769 = vpack.c.b16 %v601, %v597
    %v770 = vpack.c.b16 %v606, %v602
    %v771 = vpack.c.b16 %v607, %v603
    %v772 = vpack.c.b16 %v608, %v604
    %v773 = vpack.c.b16 %v609, %v605
    %v774 = vpack.c.b16 %v614, %v610
    %v775 = vpack.c.b16 %v615, %v611
    %v776 = vpack.c.b16 %v616, %v612
    %v777 = vpack.c.b16 %v617, %v613
    %v778 = vpack.c.b16 %v622, %v618
    %v779 = vpack.c.b16 %v623, %v619
    %v780 = vpack.c.b16 %v624, %v620
    %v781 = vpack.c.b16 %v625, %v621
    %v782 = vpack.c.b16 %v630, %v626
    %v783 = vpack.c.b16 %v631, %v627
    %v784 = vpack.c.b16 %v632, %v628
    %v785 = vpack.c.b16 %v633, %v629
    %v786 = vpack.c.b16 %v638, %v634
    %v787 = vpack.c.b16 %v639, %v635
    %v788 = vpack.c.b16 %v640, %v636
    %v789 = vpack.c.b16 %v641, %v637
    %v790 = vpack.c.b16 %v646, %v642
    %v791 = vpack.c.b16 %v647, %v643
    %v792 = vpack.c.b16 %v648, %v644
    %v793 = vpack.c.b16 %v649, %v645
    %v794 = vpack.c.b16 %v654, %v650
    %v795 = vpack.c.b16 %v655, %v651
    %v796 = vpack.c.b16 %v656, %v652
    %v797 = vpack.c.b16 %v657, %v653
    %v798 = vpack.c.b16 %v662, %v658
    %v799 = vpack.c.b16 %v663, %v659
    %v800 = vpack.c.b16 %v664, %v660
    %v801 = vpack.c.b16 %v665, %v661
    %v802 = vpack.c.b16 %v670, %v666
    %v803 = vpack.c.b16 %v671, %v667
    %v804 = vpack.c.b16 %v672, %v668
    %v805 = vpack.c.b16 %v673, %v669
    %v806 = vpack.c.b16 %v678, %v674
    %v807 = vpack.c.b16 %v679, %v675
    %v808 = vpack.c.b16 %v680, %v676
    %v809 = vpack.c.b16 %v681, %v677
    %938 = vmatprep.subr.bf16.mxu0 %v711
    %939 = vmatpush1.bf16.msra.mxu0 %v710
    %940 = vmatprep.subr.bf16.mxu0 %v707
    %941 = vmatpush1.bf16.msra.mxu0 %v706
    %942 = vmatprep.subr.bf16.mxu0 %v703
    %943 = vmatpush1.bf16.msra.mxu0 %v702
    %944 = vmatprep.subr.bf16.mxu0 %v699
    %945 = vmatpush1.bf16.msra.mxu0 %v698
    %946 = vmatprep.subr.bf16.mxu0 %v695
    %947 = vmatpush1.bf16.msra.mxu0 %v694
    %948 = vmatprep.subr.bf16.mxu0 %v691
    %949 = vmatpush1.bf16.msra.mxu0 %v690
    %950 = vmatprep.subr.bf16.mxu0 %v687
    %951 = vmatpush1.bf16.msra.mxu0 %v686
    %952 = vmatprep.subr.bf16.mxu0 %v683
    %953 = vmatpush1.bf16.msra.mxu0 %v682
    %954 = vmatprep.subr.bf16.mxu0 %v743
    %955 = vmatpush2.bf16.msra.mxu0 %v742
    %956 = vmatprep.subr.bf16.mxu0 %v739
    %957 = vmatpush2.bf16.msra.mxu0 %v738
    %958 = vmatprep.subr.bf16.mxu0 %v735
    %959 = vmatpush2.bf16.msra.mxu0 %v734
    %960 = vmatprep.subr.bf16.mxu0 %v731
    %961 = vmatpush2.bf16.msra.mxu0 %v730
    %962 = vmatprep.subr.bf16.mxu0 %v727
    %963 = vmatpush2.bf16.msra.mxu0 %v726
    %964 = vmatprep.subr.bf16.mxu0 %v723
    %965 = vmatpush2.bf16.msra.mxu0 %v722
    %966 = vmatprep.subr.bf16.mxu0 %v719
    %967 = vmatpush2.bf16.msra.mxu0 %v718
    %968 = vmatprep.subr.bf16.mxu0 %v715
    %969 = vmatpush2.bf16.msra.mxu0 %v714
    %970 = vmatprep.mubr.bf16.mxu0 %v146
    %971 = vmatmul.mubr.bf16.gmra.mxu0 %v145
    %v972 = vpop.f32.mrf.mxu0
    %v973 = vadd.f32 %v281, %v972
    %v974 = vpop.f32.mrf.mxu0
    %v975 = vadd.f32 %v285, %v974
    %v976 = vpop.f32.mrf.mxu0
    %v977 = vpop.f32.mrf.mxu0
    %978 = vdwg.mxu0
    %979 = vmatprep.subr.bf16.mxu0 %v775
    %980 = vmatpush1.bf16.msra.mxu0 %v774
    %981 = vmatprep.subr.bf16.mxu0 %v771
    %982 = vmatpush1.bf16.msra.mxu0 %v770
    %983 = vmatprep.subr.bf16.mxu0 %v767
    %984 = vmatpush1.bf16.msra.mxu0 %v766
    %985 = vmatprep.subr.bf16.mxu0 %v763
    %986 = vmatpush1.bf16.msra.mxu0 %v762
    %987 = vmatprep.subr.bf16.mxu0 %v759
    %988 = vmatpush1.bf16.msra.mxu0 %v758
    %989 = vmatprep.subr.bf16.mxu0 %v755
    %990 = vmatpush1.bf16.msra.mxu0 %v754
    %991 = vmatprep.subr.bf16.mxu0 %v751
    %992 = vmatpush1.bf16.msra.mxu0 %v750
    %993 = vmatprep.subr.bf16.mxu0 %v747
    %994 = vmatpush1.bf16.msra.mxu0 %v746
    %995 = vmatprep.subr.bf16.mxu0 %v807
    %996 = vmatpush2.bf16.msra.mxu0 %v806
    %997 = vmatprep.subr.bf16.mxu0 %v803
    %998 = vmatpush2.bf16.msra.mxu0 %v802
    %999 = vmatprep.subr.bf16.mxu0 %v799
    %1000 = vmatpush2.bf16.msra.mxu0 %v798
    %1001 = vmatprep.subr.bf16.mxu0 %v795
    %1002 = vmatpush2.bf16.msra.mxu0 %v794
    %1003 = vmatprep.subr.bf16.mxu0 %v791
    %1004 = vmatpush2.bf16.msra.mxu0 %v790
    %1005 = vmatprep.subr.bf16.mxu0 %v787
    %1006 = vmatpush2.bf16.msra.mxu0 %v786
    %1007 = vmatprep.subr.bf16.mxu0 %v783
    %1008 = vmatpush2.bf16.msra.mxu0 %v782
    %1009 = vmatprep.subr.bf16.mxu0 %v779
    %1010 = vmatpush2.bf16.msra.mxu0 %v778
    %1011 = vmatprep.mubr.bf16.mxu0 %v148
    %1012 = vmatmul.mubr.bf16.gmra.mxu0 %v147
    %v1013 = vpop.f32.mrf.mxu0
    %v1014 = vadd.f32 %v973, %v1013
    %v1015 = vpop.f32.mrf.mxu0
    %v1016 = vadd.f32 %v975, %v1015
    %v1017 = vpop.f32.mrf.mxu0
    %v1018 = vpop.f32.mrf.mxu0
    %1019 = vdwg.mxu0
    %1020 = vmatprep.subr.bf16.mxu0 %v713
    %1021 = vmatpush1.bf16.msra.mxu0 %v712
    %1022 = vmatprep.subr.bf16.mxu0 %v709
    %1023 = vmatpush1.bf16.msra.mxu0 %v708
    %1024 = vmatprep.subr.bf16.mxu0 %v705
    %1025 = vmatpush1.bf16.msra.mxu0 %v704
    %1026 = vmatprep.subr.bf16.mxu0 %v701
    %1027 = vmatpush1.bf16.msra.mxu0 %v700
    %1028 = vmatprep.subr.bf16.mxu0 %v697
    %1029 = vmatpush1.bf16.msra.mxu0 %v696
    %1030 = vmatprep.subr.bf16.mxu0 %v693
    %1031 = vmatpush1.bf16.msra.mxu0 %v692
    %1032 = vmatprep.subr.bf16.mxu0 %v689
    %1033 = vmatpush1.bf16.msra.mxu0 %v688
    %1034 = vmatprep.subr.bf16.mxu0 %v685
    %1035 = vmatpush1.bf16.msra.mxu0 %v684
    %1036 = vmatprep.subr.bf16.mxu0 %v745
    %1037 = vmatpush2.bf16.msra.mxu0 %v744
    %1038 = vmatprep.subr.bf16.mxu0 %v741
    %1039 = vmatpush2.bf16.msra.mxu0 %v740
    %1040 = vmatprep.subr.bf16.mxu0 %v737
    %1041 = vmatpush2.bf16.msra.mxu0 %v736
    %1042 = vmatprep.subr.bf16.mxu0 %v733
    %1043 = vmatpush2.bf16.msra.mxu0 %v732
    %1044 = vmatprep.subr.bf16.mxu0 %v729
    %1045 = vmatpush2.bf16.msra.mxu0 %v728
    %1046 = vmatprep.subr.bf16.mxu0 %v725
    %1047 = vmatpush2.bf16.msra.mxu0 %v724
    %1048 = vmatprep.subr.bf16.mxu0 %v721
    %1049 = vmatpush2.bf16.msra.mxu0 %v720
    %1050 = vmatprep.subr.bf16.mxu0 %v717
    %1051 = vmatpush2.bf16.msra.mxu0 %v716
    %1052 = vmatprep.mubr.bf16.mxu0 %v146
    %1053 = vmatmul.mubr.bf16.gmra.mxu0 %v145
    %v1054 = vpop.f32.mrf.mxu0
    %v1055 = vadd.f32 %v289, %v1054
    %v1056 = vpop.f32.mrf.mxu0
    %v1057 = vadd.f32 %v293, %v1056
    %v1058 = vpop.f32.mrf.mxu0
    %v1059 = vpop.f32.mrf.mxu0
    %1060 = vdwg.mxu0
    %1061 = vmatprep.subr.bf16.mxu0 %v777
    %1062 = vmatpush1.bf16.msra.mxu0 %v776
    %1063 = vmatprep.subr.bf16.mxu0 %v773
    %1064 = vmatpush1.bf16.msra.mxu0 %v772
    %1065 = vmatprep.subr.bf16.mxu0 %v769
    %1066 = vmatpush1.bf16.msra.mxu0 %v768
    %1067 = vmatprep.subr.bf16.mxu0 %v765
    %1068 = vmatpush1.bf16.msra.mxu0 %v764
    %1069 = vmatprep.subr.bf16.mxu0 %v761
    %1070 = vmatpush1.bf16.msra.mxu0 %v760
    %1071 = vmatprep.subr.bf16.mxu0 %v757
    %1072 = vmatpush1.bf16.msra.mxu0 %v756
    %1073 = vmatprep.subr.bf16.mxu0 %v753
    %1074 = vmatpush1.bf16.msra.mxu0 %v752
    %1075 = vmatprep.subr.bf16.mxu0 %v749
    %1076 = vmatpush1.bf16.msra.mxu0 %v748
    %1077 = vmatprep.subr.bf16.mxu0 %v809
    %1078 = vmatpush2.bf16.msra.mxu0 %v808
    %1079 = vmatprep.subr.bf16.mxu0 %v805
    %1080 = vmatpush2.bf16.msra.mxu0 %v804
    %1081 = vmatprep.subr.bf16.mxu0 %v801
    %1082 = vmatpush2.bf16.msra.mxu0 %v800
    %1083 = vmatprep.subr.bf16.mxu0 %v797
    %1084 = vmatpush2.bf16.msra.mxu0 %v796
    %1085 = vmatprep.subr.bf16.mxu0 %v793
    %1086 = vmatpush2.bf16.msra.mxu0 %v792
    %1087 = vmatprep.subr.bf16.mxu0 %v789
    %1088 = vmatpush2.bf16.msra.mxu0 %v788
    %1089 = vmatprep.subr.bf16.mxu0 %v785
    %1090 = vmatpush2.bf16.msra.mxu0 %v784
    %1091 = vmatprep.subr.bf16.mxu0 %v781
    %1092 = vmatpush2.bf16.msra.mxu0 %v780
    %1093 = vmatprep.mubr.bf16.mxu0 %v148
    %1094 = vmatmul.mubr.bf16.gmra.mxu0 %v147
    %v1095 = vpop.f32.mrf.mxu0
    %v1096 = vadd.f32 %v1055, %v1095
    %v1097 = vpop.f32.mrf.mxu0
    %v1098 = vadd.f32 %v1057, %v1097
    %v1099 = vpop.f32.mrf.mxu0
    %v1100 = vpop.f32.mrf.mxu0
    %1101 = vdwg.mxu0
    %v1103 = vlaneseq
    %v1104 = vshrl.u32 %v1103, 7
    %v1105 = vsub.s32 0, %v1104
    %v1106 = vrot.slane %v144, %v1105
    %v1107 = vlaneseq
    %v1108 = vshrl.u32 %v1107, 7
    %v1109 = vsub.s32 1, %v1108
    %v1110 = vrot.slane %v144, %v1109
    %v1111 = vlaneseq
    %v1112 = vshrl.u32 %v1111, 7
    %v1113 = vsub.s32 2, %v1112
    %v1114 = vrot.slane %v144, %v1113
    %v1115 = vlaneseq
    %v1116 = vshrl.u32 %v1115, 7
    %v1117 = vsub.s32 3, %v1116
    %v1118 = vrot.slane %v144, %v1117
    %v1123 = vmul.f32 %v140, %v1106
    %v1124 = vmul.f32 %v140, %v1110
    %v1125 = vmul.f32 %v140, %v1114
    %v1126 = vmul.f32 %v140, %v1118
    %v1127 = vadd.f32 %v1014, %v1123
    %v1128 = vadd.f32 %v1016, %v1124
    %v1129 = vadd.f32 %v1096, %v1125
    %v1130 = vadd.f32 %v1098, %v1126
    %v1131 = vmul.f32 %v1127, 0.2
    %v1132 = vmul.f32 %v1128, 0.2
    %v1133 = vmul.f32 %v1129, 0.2
    %v1134 = vmul.f32 %v1130, 0.2
    %v1135 = vmax.f32 %v1127, %v1131
    %v1136 = vmax.f32 %v1128, %v1132
    %v1137 = vmax.f32 %v1129, %v1133
    %v1138 = vmax.f32 %v1130, %v1134
    %v1139 = vmul.f32 %v1135, 1.4142135
    %v1140 = vmul.f32 %v1136, 1.4142135
    %v1141 = vmul.f32 %v1137, 1.4142135
    %v1142 = vmul.f32 %v1138, 1.4142135
    %v1143 = vld [vmem:[%s3] sm:$0xff]
    %v1144 = vld [vmem:[%s3 + $0x8] sm:$0xff]
    %v1145 = vld [vmem:[%s3 + $0x10] sm:$0xff]
    %v1146 = vld [vmem:[%s3 + $0x18] sm:$0xff]
    %v1147 = vld [vmem:[%s4 + $0x8] sm:$0x1]
    %v1148 = vlaneseq
    %v1149 = vshrl.u32 %v1148, 7
    %v1150 = vsub.s32 0, %v1149
    %v1151 = vrot.slane %v1147, %v1150
    %1152 = vmatprep.subr.mxu0 0.0
    %1153 = vmatpush1.xpose.msra.mxu0 0.0
    %1154 = vmatprep.subr.mxu0 0.0
    %1155 = vmatpush1.xpose.msra.mxu0 0.0
    %1156 = vmatprep.subr.mxu0 0.0
    %1157 = vmatpush1.xpose.msra.mxu0 0.0
    %1158 = vmatprep.subr.mxu0 0.0
    %1159 = vmatpush1.xpose.msra.mxu0 0.0
    %1160 = vmatprep.subr.mxu0 0.0
    %1161 = vmatpush1.xpose.msra.mxu0 0.0
    %1162 = vmatprep.subr.mxu0 0.0
    %1163 = vmatpush1.xpose.msra.mxu0 0.0
    %1164 = vmatprep.subr.mxu0 0.0
    %1165 = vmatpush1.xpose.msra.mxu0 0.0
    %1166 = vmatprep.subr.mxu0 0.0
    %1167 = vmatpush1.xpose.msra.mxu0 0.0
    %1168 = vmatprep.subr.mxu0 0.0
    %1169 = vmatpush1.xpose.msra.mxu0 0.0
    %1170 = vmatprep.subr.mxu0 0.0
    %1171 = vmatpush1.xpose.msra.mxu0 0.0
    %1172 = vmatprep.subr.mxu0 0.0
    %1173 = vmatpush1.xpose.msra.mxu0 0.0
    %1174 = vmatprep.subr.mxu0 0.0
    %1175 = vmatpush1.xpose.msra.mxu0 0.0
    %1176 = vmatprep.subr.mxu0 0.0
    %1177 = vmatpush1.xpose.msra.mxu0 0.0
    %1178 = vmatprep.subr.mxu0 0.0
    %1179 = vmatpush1.xpose.msra.mxu0 0.0
    %1180 = vmatprep.subr.mxu0 0.0
    %1181 = vmatpush1.xpose.msra.mxu0 0.0
    %1182 = vmatprep.subr.mxu0 %v1144
    %1183 = vmatpush1.xpose.msra.mxu0 %v1143
    %1184 = vmatprep.subr.mxu0 0.0
    %1185 = vmatpush2.xpose.msra.mxu0 0.0
    %1186 = vmatprep.subr.mxu0 0.0
    %1187 = vmatpush2.xpose.msra.mxu0 0.0
    %1188 = vmatprep.subr.mxu0 0.0
    %1189 = vmatpush2.xpose.msra.mxu0 0.0
    %1190 = vmatprep.subr.mxu0 0.0
    %1191 = vmatpush2.xpose.msra.mxu0 0.0
    %1192 = vmatprep.subr.mxu0 0.0
    %1193 = vmatpush2.xpose.msra.mxu0 0.0
    %1194 = vmatprep.subr.mxu0 0.0
    %1195 = vmatpush2.xpose.msra.mxu0 0.0
    %1196 = vmatprep.subr.mxu0 0.0
    %1197 = vmatpush2.xpose.msra.mxu0 0.0
    %1198 = vmatprep.subr.mxu0 0.0
    %1199 = vmatpush2.xpose.msra.mxu0 0.0
    %1200 = vmatprep.subr.mxu0 0.0
    %1201 = vmatpush2.xpose.msra.mxu0 0.0
    %1202 = vmatprep.subr.mxu0 0.0
    %1203 = vmatpush2.xpose.msra.mxu0 0.0
    %1204 = vmatprep.subr.mxu0 0.0
    %1205 = vmatpush2.xpose.msra.mxu0 0.0
    %1206 = vmatprep.subr.mxu0 0.0
    %1207 = vmatpush2.xpose.msra.mxu0 0.0
    %1208 = vmatprep.subr.mxu0 0.0
    %1209 = vmatpush2.xpose.msra.mxu0 0.0
    %1210 = vmatprep.subr.mxu0 0.0
    %1211 = vmatpush2.xpose.msra.mxu0 0.0
    %1212 = vmatprep.subr.mxu0 0.0
    %1213 = vmatpush2.xpose.msra.mxu0 0.0
    %1214 = vmatprep.subr.mxu0 0.0
    %1215 = vmatpush2.xpose.msra.mxu0 0.0
    %1216 = vmatprep.mubr.f32.mxu0 %v1140
    %1217 = vmatmul.mubr.f32.gmra.mxu0 %v1139
    %v1218 = vpop.f32.mrf.mxu0
    %v1219 = vadd.f32 %v1151, %v1218
    %v1220 = vpop.f32.mrf.mxu0
    %1221 = vdwg.mxu0
    %1222 = vmatprep.subr.mxu0 0.0
    %1223 = vmatpush1.xpose.msra.mxu0 0.0
    %1224 = vmatprep.subr.mxu0 0.0
    %1225 = vmatpush1.xpose.msra.mxu0 0.0
    %1226 = vmatprep.subr.mxu0 0.0
    %1227 = vmatpush1.xpose.msra.mxu0 0.0
    %1228 = vmatprep.subr.mxu0 0.0
    %1229 = vmatpush1.xpose.msra.mxu0 0.0
    %1230 = vmatprep.subr.mxu0 0.0
    %1231 = vmatpush1.xpose.msra.mxu0 0.0
    %1232 = vmatprep.subr.mxu0 0.0
    %1233 = vmatpush1.xpose.msra.mxu0 0.0
    %1234 = vmatprep.subr.mxu0 0.0
    %1235 = vmatpush1.xpose.msra.mxu0 0.0
    %1236 = vmatprep.subr.mxu0 0.0
    %1237 = vmatpush1.xpose.msra.mxu0 0.0
    %1238 = vmatprep.subr.mxu0 0.0
    %1239 = vmatpush1.xpose.msra.mxu0 0.0
    %1240 = vmatprep.subr.mxu0 0.0
    %1241 = vmatpush1.xpose.msra.mxu0 0.0
    %1242 = vmatprep.subr.mxu0 0.0
    %1243 = vmatpush1.xpose.msra.mxu0 0.0
    %1244 = vmatprep.subr.mxu0 0.0
    %1245 = vmatpush1.xpose.msra.mxu0 0.0
    %1246 = vmatprep.subr.mxu0 0.0
    %1247 = vmatpush1.xpose.msra.mxu0 0.0
    %1248 = vmatprep.subr.mxu0 0.0
    %1249 = vmatpush1.xpose.msra.mxu0 0.0
    %1250 = vmatprep.subr.mxu0 0.0
    %1251 = vmatpush1.xpose.msra.mxu0 0.0
    %1252 = vmatprep.subr.mxu0 %v1146
    %1253 = vmatpush1.xpose.msra.mxu0 %v1145
    %1254 = vmatprep.subr.mxu0 0.0
    %1255 = vmatpush2.xpose.msra.mxu0 0.0
    %1256 = vmatprep.subr.mxu0 0.0
    %1257 = vmatpush2.xpose.msra.mxu0 0.0
    %1258 = vmatprep.subr.mxu0 0.0
    %1259 = vmatpush2.xpose.msra.mxu0 0.0
    %1260 = vmatprep.subr.mxu0 0.0
    %1261 = vmatpush2.xpose.msra.mxu0 0.0
    %1262 = vmatprep.subr.mxu0 0.0
    %1263 = vmatpush2.xpose.msra.mxu0 0.0
    %1264 = vmatprep.subr.mxu0 0.0
    %1265 = vmatpush2.xpose.msra.mxu0 0.0
    %1266 = vmatprep.subr.mxu0 0.0
    %1267 = vmatpush2.xpose.msra.mxu0 0.0
    %1268 = vmatprep.subr.mxu0 0.0
    %1269 = vmatpush2.xpose.msra.mxu0 0.0
    %1270 = vmatprep.subr.mxu0 0.0
    %1271 = vmatpush2.xpose.msra.mxu0 0.0
    %1272 = vmatprep.subr.mxu0 0.0
    %1273 = vmatpush2.xpose.msra.mxu0 0.0
    %1274 = vmatprep.subr.mxu0 0.0
    %1275 = vmatpush2.xpose.msra.mxu0 0.0
    %1276 = vmatprep.subr.mxu0 0.0
    %1277 = vmatpush2.xpose.msra.mxu0 0.0
    %1278 = vmatprep.subr.mxu0 0.0
    %1279 = vmatpush2.xpose.msra.mxu0 0.0
    %1280 = vmatprep.subr.mxu0 0.0
    %1281 = vmatpush2.xpose.msra.mxu0 0.0
    %1282 = vmatprep.subr.mxu0 0.0
    %1283 = vmatpush2.xpose.msra.mxu0 0.0
    %1284 = vmatprep.subr.mxu0 0.0
    %1285 = vmatpush2.xpose.msra.mxu0 0.0
    %1286 = vmatprep.mubr.f32.mxu0 %v1142
    %1287 = vmatmul.mubr.f32.gmra.mxu0 %v1141
    %v1288 = vpop.f32.mrf.mxu0
    %v1289 = vadd.f32 %v1219, %v1288
    %v1290 = vpop.f32.mrf.mxu0
    %1291 = vdwg.mxu0
    %v1292 = vmul.f32 %v1289, 0.2
    %v1293 = vmax.f32 %v1289, %v1292
    %v1294 = vmul.f32 %v1293, 1.4142135
    %v1295 = vld [vmem:[%s4] sm:$0xff]
    %v1296 = vld [vmem:[%s4 + $0x9] sm:$0x1]
    %v1297 = vlaneseq
    %v1298 = vshrl.u32 %v1297, 7
    %v1299 = vsub.s32 0, %v1298
    %v1300 = vrot.slane %v1296, %v1299
    %vm1301 = vcmask 64512
    %v1303 = vsel %vm1301, %v1294, 0
    %1305 = vmatprep.subr.mxu0 0.0
    %1306 = vmatpush1.msra.mxu0 0.0
    %1307 = vmatprep.subr.mxu0 0.0
    %1308 = vmatpush1.msra.mxu0 0.0
    %1309 = vmatprep.subr.mxu0 0.0
    %1310 = vmatpush1.msra.mxu0 0.0
    %1311 = vmatprep.subr.mxu0 0.0
    %1312 = vmatpush1.msra.mxu0 0.0
    %1313 = vmatprep.subr.mxu0 0.0
    %1314 = vmatpush1.msra.mxu0 0.0
    %1315 = vmatprep.subr.mxu0 0.0
    %1316 = vmatpush1.msra.mxu0 0.0
    %1317 = vmatprep.subr.mxu0 0.0
    %1318 = vmatpush1.msra.mxu0 0.0
    %1319 = vmatprep.subr.mxu0 0.0
    %1320 = vmatpush1.msra.mxu0 0.0
    %1321 = vmatprep.subr.mxu0 0.0
    %1322 = vmatpush1.msra.mxu0 0.0
    %1323 = vmatprep.subr.mxu0 0.0
    %1324 = vmatpush1.msra.mxu0 0.0
    %1325 = vmatprep.subr.mxu0 0.0
    %1326 = vmatpush1.msra.mxu0 0.0
    %1327 = vmatprep.subr.mxu0 0.0
    %1328 = vmatpush1.msra.mxu0 0.0
    %1329 = vmatprep.subr.mxu0 0.0
    %1330 = vmatpush1.msra.mxu0 0.0
    %1331 = vmatprep.subr.mxu0 0.0
    %1332 = vmatpush1.msra.mxu0 0.0
    %1333 = vmatprep.subr.mxu0 0.0
    %1334 = vmatpush1.msra.mxu0 0.0
    %1335 = vmatprep.subr.mxu0 0.0
    %1336 = vmatpush1.msra.mxu0 %v1295
    %1337 = vmatprep.subr.mxu0 0.0
    %1338 = vmatpush2.msra.mxu0 0.0
    %1339 = vmatprep.subr.mxu0 0.0
    %1340 = vmatpush2.msra.mxu0 0.0
    %1341 = vmatprep.subr.mxu0 0.0
    %1342 = vmatpush2.msra.mxu0 0.0
    %1343 = vmatprep.subr.mxu0 0.0
    %1344 = vmatpush2.msra.mxu0 0.0
    %1345 = vmatprep.subr.mxu0 0.0
    %1346 = vmatpush2.msra.mxu0 0.0
    %1347 = vmatprep.subr.mxu0 0.0
    %1348 = vmatpush2.msra.mxu0 0.0
    %1349 = vmatprep.subr.mxu0 0.0
    %1350 = vmatpush2.msra.mxu0 0.0
    %1351 = vmatprep.subr.mxu0 0.0
    %1352 = vmatpush2.msra.mxu0 0.0
    %1353 = vmatprep.subr.mxu0 0.0
    %1354 = vmatpush2.msra.mxu0 0.0
    %1355 = vmatprep.subr.mxu0 0.0
    %1356 = vmatpush2.msra.mxu0 0.0
    %1357 = vmatprep.subr.mxu0 0.0
    %1358 = vmatpush2.msra.mxu0 0.0
    %1359 = vmatprep.subr.mxu0 0.0
    %1360 = vmatpush2.msra.mxu0 0.0
    %1361 = vmatprep.subr.mxu0 0.0
    %1362 = vmatpush2.msra.mxu0 0.0
    %1363 = vmatprep.subr.mxu0 0.0
    %1364 = vmatpush2.msra.mxu0 0.0
    %1365 = vmatprep.subr.mxu0 0.0
    %1366 = vmatpush2.msra.mxu0 0.0
    %1367 = vmatprep.subr.mxu0 0.0
    %1368 = vmatpush2.msra.mxu0 0.0
    %1369 = vmatprep.mubr.f32.mxu0 0.0
    %1370 = vmatmul.mubr.f32.gmra.mxu0 %v1303
    %v1371 = vpop.f32.mrf.mxu0
    %v1372 = vadd.f32 %v1300, %v1371
    %v1373 = vpop.f32.mrf.mxu0
    %1374 = vdwg.mxu0
    %v1375 = vld [vmem:[%s1] sm:$0xff]
    %v1376 = vmul.f32 %v1372, %v1375
    %v1377 = vsel %vm1301, %v1376, 0.0
    %1378 = vadd.xlane.f32.xlu0 %v1377
    %v1379 = vpop.xlane.xlu0 %1378
    %vm1380 = vcmask 7168
    %1381 = vst.msk [vmem:[%s5] sm:$0xff] %vm1380, %v1379
    %1383 = vrot.lane.b32.xlu0 %v1372, 121
    %v1384 = vpop.permute.xlu0 %1383
    %vm1386 = vcmask 56328
    %1387 = vst.msk [vmem:[%s5] sm:$0xff] %vm1386, %v1384
    // Predicated region
    $region26: #{discriminator_epilogue.1} parent=1 // pred_check
      _
    $region27: #{discriminator_epilogue.1} parent=1 // pred_check_branch
      %1389 = sbr.rel (0) target = $region29
    $region28: #{discriminator_epilogue.1} parent=1 // pred_region
      _
    $region29: #{discriminator_epilogue.1} parent=1 // pred_fallthru
      _
    // Predicated region
    $region30: #{discriminator_epilogue.1} parent=1 // pred_check
      _
    $region31: #{discriminator_epilogue.1} parent=1 // pred_check_branch
      %1391 = sbr.rel (0) target = $region33
    $region32: #{discriminator_epilogue.1} parent=1 // pred_region
      _
    $region33: #{discriminator_epilogue.1} parent=1 // pred_fallthru
      _
    %1392 = vsyncpa [#allocation3], 1

</llo_original>
